<compile_context>
chip_gen: v6e
topology: v6e:2x2x1
jax: 0.10.0
libtpu: 0.0.40
codegen_flags: <defaults>
</compile_context>

<pallas_src>
import functools

import jax
import jax.numpy as jnp
from jax.experimental import pallas as pl
from jax.experimental.pallas import tpu as pltpu

L1 = 16
L2 = 16
NUM_INPUTS = 384
PRED_SCALE = 1000.0

# Batch-tile rows. 1024 * 768 * 4 B = 3 MiB per x buffer (x2 double-buffered),
# comfortably inside default scoped VMEM on v5e/v6e/v7x while sitting on the
# measured ~85% HBM-roofline plateau for mem-bound tiles.
DEFAULT_TB = 1024


def _round_up(n, m):
    return ((n + m - 1) // m) * m


def bbnnc_kernel(x_ref, w_side_ref, b_side_ref, wi_ref, bi_ref, wo_ref, y_ref):
    # x tile: [TB, 2*NUM_INPUTS]; all other refs are small VMEM-resident params.
    x = x_ref[...]

    # Fused "side" layer: block-diagonal [768, 32] weight applies the shared
    # 384->16 linear to both halves of x in a single MXU matmul.
    c = jnp.dot(x, w_side_ref[...],
                preferred_element_type=jnp.float32) + b_side_ref[...]
    l0 = jnp.clip(c, 0.0, 1.0)                                   # [TB, 32]

    h = jnp.dot(l0, wi_ref[...],
                preferred_element_type=jnp.float32) + bi_ref[...]
    l1 = jnp.clip(h, 0.0, 1.0)                                   # [TB, 16]

    # Output layer, lane-dense: wo_ref is [1, L2] (PRED_SCALE already folded
    # in). Contract the L2 axes of both operands -> [1, TB], batch on lanes.
    y = jax.lax.dot_general(
        wo_ref[...], l1,
        dimension_numbers=(((1,), (1,)), ((), ())),
        preferred_element_type=jnp.float32)                      # [1, TB]
    y_ref[...] = y[None]                                         # [1, 1, TB]


@functools.partial(jax.jit, static_argnames=("tb",))
def bbnnc_forward(x, ws, bs, wi, bi, wo, *, tb=DEFAULT_TB):
    B = x.shape[0]
    f32 = jnp.float32
    x = x.astype(f32)

    # ---- one-time parameter prep --------------------------------------------
    ws = ws.reshape(NUM_INPUTS, L1).astype(f32)
    w_side = jnp.zeros((2 * NUM_INPUTS, 2 * L1), f32)
    w_side = w_side.at[:NUM_INPUTS, :L1].set(ws)
    w_side = w_side.at[NUM_INPUTS:, L1:].set(ws)                 # block-diagonal
    b_side = jnp.concatenate([bs.reshape(1, L1)] * 2, axis=1).astype(f32)  # [1, 32]
    wi = wi.reshape(2 * L1, L2).astype(f32)
    bi = bi.reshape(1, L2).astype(f32)
    wo_row = (wo.reshape(L2, 1).astype(f32) * PRED_SCALE).T      # [1, L2], pre-scaled

    # ---- batch tiling --------------------------------------------------------
    TB = min(tb, _round_up(B, 8))          # shrink tile for tiny batches
    Bp = _round_up(B, TB)
    if Bp != B:
        x = jnp.pad(x, ((0, Bp - B), (0, 0)))   # padded rows are sliced off below
    n_tiles = Bp // TB

    y = pl.pallas_call(
        bbnnc_kernel,
        out_shape=jax.ShapeDtypeStruct((n_tiles, 1, TB), f32),
        grid=(n_tiles,),
        in_specs=[
            # x streams through double-buffered VMEM tiles.
            pl.BlockSpec((TB, 2 * NUM_INPUTS), lambda i: (i, 0)),
            # Params: constant index maps -> stay VMEM-resident across tiles.
            pl.BlockSpec((2 * NUM_INPUTS, 2 * L1), lambda i: (0, 0)),
            pl.BlockSpec((1, 2 * L1), lambda i: (0, 0)),
            pl.BlockSpec((2 * L1, L2), lambda i: (0, 0)),
            pl.BlockSpec((1, L2), lambda i: (0, 0)),
            pl.BlockSpec((1, L2), lambda i: (0, 0)),
        ],
        # Lane-dense output: one (1, 1, TB) block per batch tile.
        out_specs=pl.BlockSpec((1, 1, TB), lambda i: (i, 0, 0)),
        compiler_params=pltpu.CompilerParams(
            dimension_semantics=("parallel",)),   # shard batch tiles across TCs (v7x)
    )(x, w_side, b_side, wi, bi, wo_row)

    # (n_tiles, 1, TB) -> flat padded batch -> [B, 1]
    return y.reshape(Bp, 1)[:B]


def bbnnc_reference(x, ws, bs, wi, bi, wo):
    a_in, p_in = x[:, :NUM_INPUTS], x[:, NUM_INPUTS:]
    a = a_in @ ws + bs.reshape(1, L1)
    p = p_in @ ws + bs.reshape(1, L1)
    c = jnp.concatenate([a, p], axis=1)
    l0 = jnp.clip(c, 0.0, 1.0)
    h = l0 @ wi + bi.reshape(1, L2)
    l1 = jnp.clip(h, 0.0, 1.0)
    return (l1 @ wo.reshape(L2, 1)) * PRED_SCALE


if __name__ == "__main__":
    key = jax.random.PRNGKey(0)
    kx, kx2, k1, k2, k3, k4, k5 = jax.random.split(key, 7)

    # Deterministic parameter init (uniform, roughly PyTorch Linear fan-in scale).
    ws = jax.random.uniform(k1, (NUM_INPUTS, L1), dtype=jnp.float32,
                            minval=-1.0, maxval=1.0) / jnp.sqrt(float(NUM_INPUTS))
    bs = jax.random.uniform(k2, (1, L1), dtype=jnp.float32,
                            minval=-1.0, maxval=1.0) / jnp.sqrt(float(NUM_INPUTS))
    wi = jax.random.uniform(k3, (2 * L1, L2), dtype=jnp.float32,
                            minval=-1.0, maxval=1.0) / jnp.sqrt(float(2 * L1))
    bi = jax.random.uniform(k4, (1, L2), dtype=jnp.float32,
                            minval=-1.0, maxval=1.0) / jnp.sqrt(float(2 * L1))
    wo = jax.random.uniform(k5, (L2, 1), dtype=jnp.float32,
                            minval=-1.0, maxval=1.0) / jnp.sqrt(float(L2))

    # Small primary check (single tiny tile).
    B = 8
    x = jax.random.uniform(kx, (B, 2 * NUM_INPUTS), dtype=jnp.float32)
    y = jax.block_until_ready(bbnnc_forward(x, ws, bs, wi, bi, wo))
    y_ref = bbnnc_reference(x, ws, bs, wi, bi, wo)
    assert y.shape == (B, 1)
    assert jnp.allclose(y, y_ref, atol=0.2, rtol=5e-3), (y, y_ref)

    # Secondary check: exercises the multi-tile grid + batch-padding path
    # (B2 is not a multiple of the 1024-row tile).
    B2 = 2500
    x2 = jax.random.uniform(kx2, (B2, 2 * NUM_INPUTS), dtype=jnp.float32)
    y2 = jax.block_until_ready(bbnnc_forward(x2, ws, bs, wi, bi, wo))
    y2_ref = bbnnc_reference(x2, ws, bs, wi, bi, wo)
    assert y2.shape == (B2, 1)
    assert jnp.allclose(y2, y2_ref, atol=0.2, rtol=5e-3)

    print("KERNEL_OK")
</pallas_src>

<mosaic_0001>
module attributes {stable_mosaic.version = 11 : i64} {
  func.func @bbnnc_kernel(%arg0: i32, %arg1: memref<8x768xf32, #tpu.memory_space<vmem>>, %arg2: memref<768x32xf32, #tpu.memory_space<vmem>>, %arg3: memref<1x32xf32, #tpu.memory_space<vmem>>, %arg4: memref<32x16xf32, #tpu.memory_space<vmem>>, %arg5: memref<1x16xf32, #tpu.memory_space<vmem>>, %arg6: memref<1x16xf32, #tpu.memory_space<vmem>>, %arg7: memref<1x1x8xf32, #tpu.memory_space<vmem>>) attributes {dimension_semantics = [#tpu.dimension_semantics<parallel>], iteration_bounds = array<i64: 1>, scalar_prefetch = 0 : i64, scratch_operands = 0 : i64, tpu.core_type = #tpu.core_type<tc>, window_params = [{transform_indices = @transform_0, window_bounds = array<i64: 8, 768>}, {pipeline_mode = #tpu.pipeline_mode<synchronous>, transform_indices = @transform_1, window_bounds = array<i64: 768, 32>}, {pipeline_mode = #tpu.pipeline_mode<synchronous>, transform_indices = @transform_2, window_bounds = array<i64: 1, 32>}, {pipeline_mode = #tpu.pipeline_mode<synchronous>, transform_indices = @transform_3, window_bounds = array<i64: 32, 16>}, {pipeline_mode = #tpu.pipeline_mode<synchronous>, transform_indices = @transform_4, window_bounds = array<i64: 1, 16>}, {pipeline_mode = #tpu.pipeline_mode<synchronous>, transform_indices = @transform_5, window_bounds = array<i64: 1, 16>}, {transform_indices = @transform_6, window_bounds = array<i64: 1, 1, 8>}]} {
    %c0 = arith.constant 0 : index
    %c0_0 = arith.constant 0 : index
    %0 = vector.load %arg1[%c0, %c0_0] : memref<8x768xf32, #tpu.memory_space<vmem>>, vector<8x768xf32>
    %c0_1 = arith.constant 0 : index
    %c0_2 = arith.constant 0 : index
    %1 = vector.load %arg2[%c0_1, %c0_2] : memref<768x32xf32, #tpu.memory_space<vmem>>, vector<768x32xf32>
    %cst = arith.constant dense<0.000000e+00> : vector<8x32xf32>
    %2 = tpu.matmul %0, %1, %cst {dimension_numbers = #tpu.dot_dimension_numbers<[1], [0], [0], [1], [0, 0, 1, 1], [], []>} : vector<8x768xf32>, vector<768x32xf32>, vector<8x32xf32> -> vector<8x32xf32>
    %c0_3 = arith.constant 0 : index
    %c0_4 = arith.constant 0 : index
    %3 = vector.load %arg3[%c0_3, %c0_4] : memref<1x32xf32, #tpu.memory_space<vmem>>, vector<1x32xf32>
    %4 = vector.broadcast %3 : vector<1x32xf32> to vector<8x32xf32>
    %5 = arith.addf %2, %4 : vector<8x32xf32>
    %cst_5 = arith.constant 0.000000e+00 : f32
    %cst_6 = arith.constant 1.000000e+00 : f32
    %6 = vector.broadcast %cst_5 : f32 to vector<8x32xf32>
    %7 = arith.maximumf %6, %5 : vector<8x32xf32>
    %8 = vector.broadcast %cst_6 : f32 to vector<8x32xf32>
    %9 = arith.minimumf %8, %7 : vector<8x32xf32>
    %c0_7 = arith.constant 0 : index
    %c0_8 = arith.constant 0 : index
    %10 = vector.load %arg4[%c0_7, %c0_8] : memref<32x16xf32, #tpu.memory_space<vmem>>, vector<32x16xf32>
    %cst_9 = arith.constant dense<0.000000e+00> : vector<8x16xf32>
    %11 = tpu.matmul %9, %10, %cst_9 {dimension_numbers = #tpu.dot_dimension_numbers<[1], [0], [0], [1], [0, 0, 1, 1], [], []>} : vector<8x32xf32>, vector<32x16xf32>, vector<8x16xf32> -> vector<8x16xf32>
    %c0_10 = arith.constant 0 : index
    %c0_11 = arith.constant 0 : index
    %12 = vector.load %arg5[%c0_10, %c0_11] : memref<1x16xf32, #tpu.memory_space<vmem>>, vector<1x16xf32>
    %13 = vector.broadcast %12 : vector<1x16xf32> to vector<8x16xf32>
    %14 = arith.addf %11, %13 : vector<8x16xf32>
    %cst_12 = arith.constant 0.000000e+00 : f32
    %cst_13 = arith.constant 1.000000e+00 : f32
    %15 = vector.broadcast %cst_12 : f32 to vector<8x16xf32>
    %16 = arith.maximumf %15, %14 : vector<8x16xf32>
    %17 = vector.broadcast %cst_13 : f32 to vector<8x16xf32>
    %18 = arith.minimumf %17, %16 : vector<8x16xf32>
    %c0_14 = arith.constant 0 : index
    %c0_15 = arith.constant 0 : index
    %19 = vector.load %arg6[%c0_14, %c0_15] : memref<1x16xf32, #tpu.memory_space<vmem>>, vector<1x16xf32>
    %cst_16 = arith.constant dense<0.000000e+00> : vector<1x8xf32>
    %20 = tpu.matmul %19, %18, %cst_16 {dimension_numbers = #tpu.dot_dimension_numbers<[1], [1], [0], [0], [0, 0, 1, 0], [], []>} : vector<1x16xf32>, vector<8x16xf32>, vector<1x8xf32> -> vector<1x8xf32>
    %21 = vector.shape_cast %20 : vector<1x8xf32> to vector<1x1x8xf32>
    %c0_17 = arith.constant 0 : index
    %c0_18 = arith.constant 0 : index
    %c0_19 = arith.constant 0 : index
    %22 = vector.load %arg7[%c0_17, %c0_18, %c0_19] : memref<1x1x8xf32, #tpu.memory_space<vmem>>, vector<1x1x8xf32>
    tpu.vector_store %arg7[%c0_17, %c0_18, %c0_19], %21 {strides = array<i32>} : memref<1x1x8xf32, #tpu.memory_space<vmem>>, vector<1x1x8xf32>,
    return
  }
  func.func @transform_0(%arg0: i32) -> (i32, i32) {
    %c0_i32 = arith.constant 0 : i32
    %c0_i32_0 = arith.constant 0 : i32
    return %arg0, %c0_i32 : i32, i32
  }
  func.func @transform_1(%arg0: i32) -> (i32, i32) {
    %c0_i32 = arith.constant 0 : i32
    %c0_i32_0 = arith.constant 0 : i32
    %c0_i32_1 = arith.constant 0 : i32
    return %c0_i32, %c0_i32_0 : i32, i32
  }
  func.func @transform_2(%arg0: i32) -> (i32, i32) {
    %c0_i32 = arith.constant 0 : i32
    %c0_i32_0 = arith.constant 0 : i32
    %c0_i32_1 = arith.constant 0 : i32
    return %c0_i32, %c0_i32_0 : i32, i32
  }
  func.func @transform_3(%arg0: i32) -> (i32, i32) {
    %c0_i32 = arith.constant 0 : i32
    %c0_i32_0 = arith.constant 0 : i32
    %c0_i32_1 = arith.constant 0 : i32
    return %c0_i32, %c0_i32_0 : i32, i32
  }
  func.func @transform_4(%arg0: i32) -> (i32, i32) {
    %c0_i32 = arith.constant 0 : i32
    %c0_i32_0 = arith.constant 0 : i32
    %c0_i32_1 = arith.constant 0 : i32
    return %c0_i32, %c0_i32_0 : i32, i32
  }
  func.func @transform_5(%arg0: i32) -> (i32, i32) {
    %c0_i32 = arith.constant 0 : i32
    %c0_i32_0 = arith.constant 0 : i32
    %c0_i32_1 = arith.constant 0 : i32
    return %c0_i32, %c0_i32_0 : i32, i32
  }
  func.func @transform_6(%arg0: i32) -> (i32, i32, i32) {
    %c0_i32 = arith.constant 0 : i32
    %c0_i32_0 = arith.constant 0 : i32
    %c0_i32_1 = arith.constant 0 : i32
    return %arg0, %c0_i32, %c0_i32_0 : i32, i32, i32
  }
}

</mosaic_0001>

<llo_original>
// kernel: bbnnc_forward.1
$region0: #{bbnnc_forward.1}
  #allocation0 [shape = 'u32[]', space=smem, size = 0x4, offset = 0x4, fixed_abs, tag = 'smem constant byte address 0x4 - core index']
  #allocation1 [shape = 'u32[144,128]{1,0:T(1,128)}', space=vmem, size = 0x12000, scoped, tag = 'internal scratch']
  %s0 = inlined_call_operand.vmem [shape: f32[8,768], index: 0, kind: input, shape index: {}]
  %s1 = inlined_call_operand.vmem [shape: f32[768,32], index: 1, kind: input, shape index: {}]
  %s2 = inlined_call_operand.vmem [shape: f32[1,32], index: 2, kind: input, shape index: {}]
  %s3 = inlined_call_operand.vmem [shape: f32[32,16], index: 3, kind: input, shape index: {}]
  %s4 = inlined_call_operand.vmem [shape: f32[1,16], index: 4, kind: input, shape index: {}]
  %s5 = inlined_call_operand.vmem [shape: f32[1,16], index: 5, kind: input, shape index: {}]
  %s6 = inlined_call_operand.hbm [shape: f32[1,1,8], index: 6, kind: output, shape index: {}]
  %s7 = sld [smem:[#allocation0]]
  $region34: #{bbnnc_forward.1} parent=0
    _
  %s9 = ssub.s32 1, %s7
  %s10 = scalar_select 0, %s9, %s7
  $region1: #{bbnnc_forward.1} parent=0
    #allocation2 [shape = 'u8[512]{0}', space=vmem, size = 0x400, scoped, tag = 'output window, operand 0, single buffered']
    #allocation3 [shape = 's32[1]{0}', space=sflag, size = 0x4, scoped, tag = 'scoped memory for bbnnc_forward.1']
    %11 = vsyncpa [#allocation3], 0
    // Predicated region
    $region2: #{bbnnc_forward.1} parent=1 // pred_check
      _
    $region3: #{bbnnc_forward.1} parent=1 // pred_check_branch
      %13 = sbr.rel (0) target = $region5
    $region4: #{bbnnc_forward.1} parent=1 // pred_region
      _
    $region5: #{bbnnc_forward.1} parent=1 // pred_fallthru
      _
    // Predicated region
    $region6: #{bbnnc_forward.1} parent=1 // pred_check
      _
    $region7: #{bbnnc_forward.1} parent=1 // pred_check_branch
      %15 = sbr.rel (0) target = $region9
    $region8: #{bbnnc_forward.1} parent=1 // pred_region
      _
    $region9: #{bbnnc_forward.1} parent=1 // pred_fallthru
      _
    // Predicated region
    $region10: #{bbnnc_forward.1} parent=1 // pred_check
      _
    $region11: #{bbnnc_forward.1} parent=1 // pred_check_branch
      %17 = sbr.rel (0) target = $region13
    $region12: #{bbnnc_forward.1} parent=1 // pred_region
      _
    $region13: #{bbnnc_forward.1} parent=1 // pred_fallthru
      _
    // Predicated region
    $region14: #{bbnnc_forward.1} parent=1 // pred_check
      _
    $region15: #{bbnnc_forward.1} parent=1 // pred_check_branch
      %19 = sbr.rel (0) target = $region17
    $region16: #{bbnnc_forward.1} parent=1 // pred_region
      _
    $region17: #{bbnnc_forward.1} parent=1 // pred_fallthru
      _
    // Predicated region
    $region18: #{bbnnc_forward.1} parent=1 // pred_check
      _
    $region19: #{bbnnc_forward.1} parent=1 // pred_check_branch
      %21 = sbr.rel (0) target = $region21
    $region20: #{bbnnc_forward.1} parent=1 // pred_region
      _
    $region21: #{bbnnc_forward.1} parent=1 // pred_fallthru
      _
    // Predicated region
    $region22: #{bbnnc_forward.1} parent=1 // pred_check
      _
    $region23: #{bbnnc_forward.1} parent=1 // pred_check_branch
      %23 = sbr.rel (0) target = $region25
    $region24: #{bbnnc_forward.1} parent=1 // pred_region
      _
    $region25: #{bbnnc_forward.1} parent=1 // pred_fallthru
      _
    %v24 = vld [vmem:[%s0] sm:$0xff]
    %v25 = vld [vmem:[%s0 + $0x8] sm:$0xff]
    %v26 = vld [vmem:[%s0 + $0x10] sm:$0xff]
    %v27 = vld [vmem:[%s0 + $0x18] sm:$0xff]
    %v28 = vld [vmem:[%s0 + $0x20] sm:$0xff]
    %v29 = vld [vmem:[%s0 + $0x28] sm:$0xff]
    %v30 = vld [vmem:[%s1] sm:$0xff]
    %v31 = vld [vmem:[%s1 + $0x8] sm:$0xff]
    %v32 = vld [vmem:[%s1 + $0x10] sm:$0xff]
    %v33 = vld [vmem:[%s1 + $0x18] sm:$0xff]
    %v34 = vld [vmem:[%s1 + $0x20] sm:$0xff]
    %v35 = vld [vmem:[%s1 + $0x28] sm:$0xff]
    %v36 = vld [vmem:[%s1 + $0x30] sm:$0xff]
    %v37 = vld [vmem:[%s1 + $0x38] sm:$0xff]
    %v38 = vld [vmem:[%s1 + $0x40] sm:$0xff]
    %v39 = vld [vmem:[%s1 + $0x48] sm:$0xff]
    %v40 = vld [vmem:[%s1 + $0x50] sm:$0xff]
    %v41 = vld [vmem:[%s1 + $0x58] sm:$0xff]
    %v42 = vld [vmem:[%s1 + $0x60] sm:$0xff]
    %v43 = vld [vmem:[%s1 + $0x68] sm:$0xff]
    %v44 = vld [vmem:[%s1 + $0x70] sm:$0xff]
    %v45 = vld [vmem:[%s1 + $0x78] sm:$0xff]
    %v46 = vld [vmem:[%s1 + $0x80] sm:$0xff]
    %v47 = vld [vmem:[%s1 + $0x88] sm:$0xff]
    %v48 = vld [vmem:[%s1 + $0x90] sm:$0xff]
    %v49 = vld [vmem:[%s1 + $0x98] sm:$0xff]
    %v50 = vld [vmem:[%s1 + $0xa0] sm:$0xff]
    %v51 = vld [vmem:[%s1 + $0xa8] sm:$0xff]
    %v52 = vld [vmem:[%s1 + $0xb0] sm:$0xff]
    %v53 = vld [vmem:[%s1 + $0xb8] sm:$0xff]
    %v54 = vld [vmem:[%s1 + $0xc0] sm:$0xff]
    %v55 = vld [vmem:[%s1 + $0xc8] sm:$0xff]
    %v56 = vld [vmem:[%s1 + $0xd0] sm:$0xff]
    %v57 = vld [vmem:[%s1 + $0xd8] sm:$0xff]
    %v58 = vld [vmem:[%s1 + $0xe0] sm:$0xff]
    %v59 = vld [vmem:[%s1 + $0xe8] sm:$0xff]
    %v60 = vld [vmem:[%s1 + $0xf0] sm:$0xff]
    %v61 = vld [vmem:[%s1 + $0xf8] sm:$0xff]
    %v62 = vld [vmem:[%s1 + $0x100] sm:$0xff]
    %v63 = vld [vmem:[%s1 + $0x108] sm:$0xff]
    %v64 = vld [vmem:[%s1 + $0x110] sm:$0xff]
    %v65 = vld [vmem:[%s1 + $0x118] sm:$0xff]
    %v66 = vld [vmem:[%s1 + $0x120] sm:$0xff]
    %v67 = vld [vmem:[%s1 + $0x128] sm:$0xff]
    %v68 = vld [vmem:[%s1 + $0x130] sm:$0xff]
    %v69 = vld [vmem:[%s1 + $0x138] sm:$0xff]
    %v70 = vld [vmem:[%s1 + $0x140] sm:$0xff]
    %v71 = vld [vmem:[%s1 + $0x148] sm:$0xff]
    %v72 = vld [vmem:[%s1 + $0x150] sm:$0xff]
    %v73 = vld [vmem:[%s1 + $0x158] sm:$0xff]
    %v74 = vld [vmem:[%s1 + $0x160] sm:$0xff]
    %v75 = vld [vmem:[%s1 + $0x168] sm:$0xff]
    %v76 = vld [vmem:[%s1 + $0x170] sm:$0xff]
    %v77 = vld [vmem:[%s1 + $0x178] sm:$0xff]
    %v78 = vld [vmem:[%s1 + $0x180] sm:$0xff]
    %v79 = vld [vmem:[%s1 + $0x188] sm:$0xff]
    %v80 = vld [vmem:[%s1 + $0x190] sm:$0xff]
    %v81 = vld [vmem:[%s1 + $0x198] sm:$0xff]
    %v82 = vld [vmem:[%s1 + $0x1a0] sm:$0xff]
    %v83 = vld [vmem:[%s1 + $0x1a8] sm:$0xff]
    %v84 = vld [vmem:[%s1 + $0x1b0] sm:$0xff]
    %v85 = vld [vmem:[%s1 + $0x1b8] sm:$0xff]
    %v86 = vld [vmem:[%s1 + $0x1c0] sm:$0xff]
    %v87 = vld [vmem:[%s1 + $0x1c8] sm:$0xff]
    %v88 = vld [vmem:[%s1 + $0x1d0] sm:$0xff]
    %v89 = vld [vmem:[%s1 + $0x1d8] sm:$0xff]
    %v90 = vld [vmem:[%s1 + $0x1e0] sm:$0xff]
    %v91 = vld [vmem:[%s1 + $0x1e8] sm:$0xff]
    %v92 = vld [vmem:[%s1 + $0x1f0] sm:$0xff]
    %v93 = vld [vmem:[%s1 + $0x1f8] sm:$0xff]
    %v94 = vld [vmem:[%s1 + $0x200] sm:$0xff]
    %v95 = vld [vmem:[%s1 + $0x208] sm:$0xff]
    %v96 = vld [vmem:[%s1 + $0x210] sm:$0xff]
    %v97 = vld [vmem:[%s1 + $0x218] sm:$0xff]
    %v98 = vld [vmem:[%s1 + $0x220] sm:$0xff]
    %v99 = vld [vmem:[%s1 + $0x228] sm:$0xff]
    %v100 = vld [vmem:[%s1 + $0x230] sm:$0xff]
    %v101 = vld [vmem:[%s1 + $0x238] sm:$0xff]
    %v102 = vld [vmem:[%s1 + $0x240] sm:$0xff]
    %v103 = vld [vmem:[%s1 + $0x248] sm:$0xff]
    %v104 = vld [vmem:[%s1 + $0x250] sm:$0xff]
    %v105 = vld [vmem:[%s1 + $0x258] sm:$0xff]
    %v106 = vld [vmem:[%s1 + $0x260] sm:$0xff]
    %v107 = vld [vmem:[%s1 + $0x268] sm:$0xff]
    %v108 = vld [vmem:[%s1 + $0x270] sm:$0xff]
    %v109 = vld [vmem:[%s1 + $0x278] sm:$0xff]
    %v110 = vld [vmem:[%s1 + $0x280] sm:$0xff]
    %v111 = vld [vmem:[%s1 + $0x288] sm:$0xff]
    %v112 = vld [vmem:[%s1 + $0x290] sm:$0xff]
    %v113 = vld [vmem:[%s1 + $0x298] sm:$0xff]
    %v114 = vld [vmem:[%s1 + $0x2a0] sm:$0xff]
    %v115 = vld [vmem:[%s1 + $0x2a8] sm:$0xff]
    %v116 = vld [vmem:[%s1 + $0x2b0] sm:$0xff]
    %v117 = vld [vmem:[%s1 + $0x2b8] sm:$0xff]
    %v118 = vld [vmem:[%s1 + $0x2c0] sm:$0xff]
    %v119 = vld [vmem:[%s1 + $0x2c8] sm:$0xff]
    %v120 = vld [vmem:[%s1 + $0x2d0] sm:$0xff]
    %v121 = vld [vmem:[%s1 + $0x2d8] sm:$0xff]
    %v122 = vld [vmem:[%s1 + $0x2e0] sm:$0xff]
    %v123 = vld [vmem:[%s1 + $0x2e8] sm:$0xff]
    %v124 = vld [vmem:[%s1 + $0x2f0] sm:$0xff]
    %v125 = vld [vmem:[%s1 + $0x2f8] sm:$0xff]
    %v126 = vld [vmem:[%s2] sm:$0x1]
    %v128 = vlaneseq
    %v129 = vshrl.u32 %v128, 7
    %v130 = vsub.s32 0, %v129
    %v131 = vrot.slane %v126, %v130
    %133 = vmatprep.subr.mxu0 0.0
    %134 = vmatpush1.msra.mxu0 %v45
    %135 = vmatprep.subr.mxu0 0.0
    %136 = vmatpush1.msra.mxu0 %v44
    %137 = vmatprep.subr.mxu0 0.0
    %138 = vmatpush1.msra.mxu0 %v43
    %139 = vmatprep.subr.mxu0 0.0
    %140 = vmatpush1.msra.mxu0 %v42
    %141 = vmatprep.subr.mxu0 0.0
    %142 = vmatpush1.msra.mxu0 %v41
    %143 = vmatprep.subr.mxu0 0.0
    %144 = vmatpush1.msra.mxu0 %v40
    %145 = vmatprep.subr.mxu0 0.0
    %146 = vmatpush1.msra.mxu0 %v39
    %147 = vmatprep.subr.mxu0 0.0
    %148 = vmatpush1.msra.mxu0 %v38
    %149 = vmatprep.subr.mxu0 0.0
    %150 = vmatpush1.msra.mxu0 %v37
    %151 = vmatprep.subr.mxu0 0.0
    %152 = vmatpush1.msra.mxu0 %v36
    %153 = vmatprep.subr.mxu0 0.0
    %154 = vmatpush1.msra.mxu0 %v35
    %155 = vmatprep.subr.mxu0 0.0
    %156 = vmatpush1.msra.mxu0 %v34
    %157 = vmatprep.subr.mxu0 0.0
    %158 = vmatpush1.msra.mxu0 %v33
    %159 = vmatprep.subr.mxu0 0.0
    %160 = vmatpush1.msra.mxu0 %v32
    %161 = vmatprep.subr.mxu0 0.0
    %162 = vmatpush1.msra.mxu0 %v31
    %163 = vmatprep.subr.mxu0 0.0
    %164 = vmatpush1.msra.mxu0 %v30
    %165 = vmatprep.subr.mxu0 0.0
    %166 = vmatpush2.msra.mxu0 %v61
    %167 = vmatprep.subr.mxu0 0.0
    %168 = vmatpush2.msra.mxu0 %v60
    %169 = vmatprep.subr.mxu0 0.0
    %170 = vmatpush2.msra.mxu0 %v59
    %171 = vmatprep.subr.mxu0 0.0
    %172 = vmatpush2.msra.mxu0 %v58
    %173 = vmatprep.subr.mxu0 0.0
    %174 = vmatpush2.msra.mxu0 %v57
    %175 = vmatprep.subr.mxu0 0.0
    %176 = vmatpush2.msra.mxu0 %v56
    %177 = vmatprep.subr.mxu0 0.0
    %178 = vmatpush2.msra.mxu0 %v55
    %179 = vmatprep.subr.mxu0 0.0
    %180 = vmatpush2.msra.mxu0 %v54
    %181 = vmatprep.subr.mxu0 0.0
    %182 = vmatpush2.msra.mxu0 %v53
    %183 = vmatprep.subr.mxu0 0.0
    %184 = vmatpush2.msra.mxu0 %v52
    %185 = vmatprep.subr.mxu0 0.0
    %186 = vmatpush2.msra.mxu0 %v51
    %187 = vmatprep.subr.mxu0 0.0
    %188 = vmatpush2.msra.mxu0 %v50
    %189 = vmatprep.subr.mxu0 0.0
    %190 = vmatpush2.msra.mxu0 %v49
    %191 = vmatprep.subr.mxu0 0.0
    %192 = vmatpush2.msra.mxu0 %v48
    %193 = vmatprep.subr.mxu0 0.0
    %194 = vmatpush2.msra.mxu0 %v47
    %195 = vmatprep.subr.mxu0 0.0
    %196 = vmatpush2.msra.mxu0 %v46
    %197 = vmatprep.mubr.f32.mxu0 %v25
    %198 = vmatmul.mubr.f32.gmra.mxu0 %v24
    %v199 = vpop.f32.mrf.mxu0
    %v200 = vadd.f32 %v131, %v199
    %v201 = vpop.f32.mrf.mxu0
    %202 = vdwg.mxu0
    %203 = vmatprep.subr.mxu0 0.0
    %204 = vmatpush1.msra.mxu0 %v77
    %205 = vmatprep.subr.mxu0 0.0
    %206 = vmatpush1.msra.mxu0 %v76
    %207 = vmatprep.subr.mxu0 0.0
    %208 = vmatpush1.msra.mxu0 %v75
    %209 = vmatprep.subr.mxu0 0.0
    %210 = vmatpush1.msra.mxu0 %v74
    %211 = vmatprep.subr.mxu0 0.0
    %212 = vmatpush1.msra.mxu0 %v73
    %213 = vmatprep.subr.mxu0 0.0
    %214 = vmatpush1.msra.mxu0 %v72
    %215 = vmatprep.subr.mxu0 0.0
    %216 = vmatpush1.msra.mxu0 %v71
    %217 = vmatprep.subr.mxu0 0.0
    %218 = vmatpush1.msra.mxu0 %v70
    %219 = vmatprep.subr.mxu0 0.0
    %220 = vmatpush1.msra.mxu0 %v69
    %221 = vmatprep.subr.mxu0 0.0
    %222 = vmatpush1.msra.mxu0 %v68
    %223 = vmatprep.subr.mxu0 0.0
    %224 = vmatpush1.msra.mxu0 %v67
    %225 = vmatprep.subr.mxu0 0.0
    %226 = vmatpush1.msra.mxu0 %v66
    %227 = vmatprep.subr.mxu0 0.0
    %228 = vmatpush1.msra.mxu0 %v65
    %229 = vmatprep.subr.mxu0 0.0
    %230 = vmatpush1.msra.mxu0 %v64
    %231 = vmatprep.subr.mxu0 0.0
    %232 = vmatpush1.msra.mxu0 %v63
    %233 = vmatprep.subr.mxu0 0.0
    %234 = vmatpush1.msra.mxu0 %v62
    %235 = vmatprep.subr.mxu0 0.0
    %236 = vmatpush2.msra.mxu0 %v93
    %237 = vmatprep.subr.mxu0 0.0
    %238 = vmatpush2.msra.mxu0 %v92
    %239 = vmatprep.subr.mxu0 0.0
    %240 = vmatpush2.msra.mxu0 %v91
    %241 = vmatprep.subr.mxu0 0.0
    %242 = vmatpush2.msra.mxu0 %v90
    %243 = vmatprep.subr.mxu0 0.0
    %244 = vmatpush2.msra.mxu0 %v89
    %245 = vmatprep.subr.mxu0 0.0
    %246 = vmatpush2.msra.mxu0 %v88
    %247 = vmatprep.subr.mxu0 0.0
    %248 = vmatpush2.msra.mxu0 %v87
    %249 = vmatprep.subr.mxu0 0.0
    %250 = vmatpush2.msra.mxu0 %v86
    %251 = vmatprep.subr.mxu0 0.0
    %252 = vmatpush2.msra.mxu0 %v85
    %253 = vmatprep.subr.mxu0 0.0
    %254 = vmatpush2.msra.mxu0 %v84
    %255 = vmatprep.subr.mxu0 0.0
    %256 = vmatpush2.msra.mxu0 %v83
    %257 = vmatprep.subr.mxu0 0.0
    %258 = vmatpush2.msra.mxu0 %v82
    %259 = vmatprep.subr.mxu0 0.0
    %260 = vmatpush2.msra.mxu0 %v81
    %261 = vmatprep.subr.mxu0 0.0
    %262 = vmatpush2.msra.mxu0 %v80
    %263 = vmatprep.subr.mxu0 0.0
    %264 = vmatpush2.msra.mxu0 %v79
    %265 = vmatprep.subr.mxu0 0.0
    %266 = vmatpush2.msra.mxu0 %v78
    %267 = vmatprep.mubr.f32.mxu0 %v27
    %268 = vmatmul.mubr.f32.gmra.mxu0 %v26
    %v269 = vpop.f32.mrf.mxu0
    %v270 = vadd.f32 %v200, %v269
    %v271 = vpop.f32.mrf.mxu0
    %272 = vdwg.mxu0
    %273 = vmatprep.subr.mxu0 0.0
    %274 = vmatpush1.msra.mxu0 %v109
    %275 = vmatprep.subr.mxu0 0.0
    %276 = vmatpush1.msra.mxu0 %v108
    %277 = vmatprep.subr.mxu0 0.0
    %278 = vmatpush1.msra.mxu0 %v107
    %279 = vmatprep.subr.mxu0 0.0
    %280 = vmatpush1.msra.mxu0 %v106
    %281 = vmatprep.subr.mxu0 0.0
    %282 = vmatpush1.msra.mxu0 %v105
    %283 = vmatprep.subr.mxu0 0.0
    %284 = vmatpush1.msra.mxu0 %v104
    %285 = vmatprep.subr.mxu0 0.0
    %286 = vmatpush1.msra.mxu0 %v103
    %287 = vmatprep.subr.mxu0 0.0
    %288 = vmatpush1.msra.mxu0 %v102
    %289 = vmatprep.subr.mxu0 0.0
    %290 = vmatpush1.msra.mxu0 %v101
    %291 = vmatprep.subr.mxu0 0.0
    %292 = vmatpush1.msra.mxu0 %v100
    %293 = vmatprep.subr.mxu0 0.0
    %294 = vmatpush1.msra.mxu0 %v99
    %295 = vmatprep.subr.mxu0 0.0
    %296 = vmatpush1.msra.mxu0 %v98
    %297 = vmatprep.subr.mxu0 0.0
    %298 = vmatpush1.msra.mxu0 %v97
    %299 = vmatprep.subr.mxu0 0.0
    %300 = vmatpush1.msra.mxu0 %v96
    %301 = vmatprep.subr.mxu0 0.0
    %302 = vmatpush1.msra.mxu0 %v95
    %303 = vmatprep.subr.mxu0 0.0
    %304 = vmatpush1.msra.mxu0 %v94
    %305 = vmatprep.subr.mxu0 0.0
    %306 = vmatpush2.msra.mxu0 %v125
    %307 = vmatprep.subr.mxu0 0.0
    %308 = vmatpush2.msra.mxu0 %v124
    %309 = vmatprep.subr.mxu0 0.0
    %310 = vmatpush2.msra.mxu0 %v123
    %311 = vmatprep.subr.mxu0 0.0
    %312 = vmatpush2.msra.mxu0 %v122
    %313 = vmatprep.subr.mxu0 0.0
    %314 = vmatpush2.msra.mxu0 %v121
    %315 = vmatprep.subr.mxu0 0.0
    %316 = vmatpush2.msra.mxu0 %v120
    %317 = vmatprep.subr.mxu0 0.0
    %318 = vmatpush2.msra.mxu0 %v119
    %319 = vmatprep.subr.mxu0 0.0
    %320 = vmatpush2.msra.mxu0 %v118
    %321 = vmatprep.subr.mxu0 0.0
    %322 = vmatpush2.msra.mxu0 %v117
    %323 = vmatprep.subr.mxu0 0.0
    %324 = vmatpush2.msra.mxu0 %v116
    %325 = vmatprep.subr.mxu0 0.0
    %326 = vmatpush2.msra.mxu0 %v115
    %327 = vmatprep.subr.mxu0 0.0
    %328 = vmatpush2.msra.mxu0 %v114
    %329 = vmatprep.subr.mxu0 0.0
    %330 = vmatpush2.msra.mxu0 %v113
    %331 = vmatprep.subr.mxu0 0.0
    %332 = vmatpush2.msra.mxu0 %v112
    %333 = vmatprep.subr.mxu0 0.0
    %334 = vmatpush2.msra.mxu0 %v111
    %335 = vmatprep.subr.mxu0 0.0
    %336 = vmatpush2.msra.mxu0 %v110
    %337 = vmatprep.mubr.f32.mxu0 %v29
    %338 = vmatmul.mubr.f32.gmra.mxu0 %v28
    %v339 = vpop.f32.mrf.mxu0
    %v340 = vadd.f32 %v270, %v339
    %v341 = vpop.f32.mrf.mxu0
    %342 = vdwg.mxu0
    %v343 = vmax.f32 %v340, 0.0
    %v344 = vmin.f32 %v343, 1.0
    %v345 = vld [vmem:[%s3] sm:$0xff]
    %v346 = vld [vmem:[%s3 + $0x8] sm:$0xff]
    %v347 = vld [vmem:[%s3 + $0x10] sm:$0xff]
    %v348 = vld [vmem:[%s3 + $0x18] sm:$0xff]
    %v349 = vld [vmem:[%s4] sm:$0x1]
    %v351 = vlaneseq
    %v352 = vshrl.u32 %v351, 7
    %v353 = vsub.s32 0, %v352
    %v354 = vrot.slane %v349, %v353
    %vm356 = vcmask 261120
    %v358 = vsel %vm356, %v344, 0
    %360 = vmatprep.subr.mxu0 0.0
    %361 = vmatpush1.msra.mxu0 0.0
    %362 = vmatprep.subr.mxu0 0.0
    %363 = vmatpush1.msra.mxu0 0.0
    %364 = vmatprep.subr.mxu0 0.0
    %365 = vmatpush1.msra.mxu0 0.0
    %366 = vmatprep.subr.mxu0 0.0
    %367 = vmatpush1.msra.mxu0 0.0
    %368 = vmatprep.subr.mxu0 0.0
    %369 = vmatpush1.msra.mxu0 0.0
    %370 = vmatprep.subr.mxu0 0.0
    %371 = vmatpush1.msra.mxu0 0.0
    %372 = vmatprep.subr.mxu0 0.0
    %373 = vmatpush1.msra.mxu0 0.0
    %374 = vmatprep.subr.mxu0 0.0
    %375 = vmatpush1.msra.mxu0 0.0
    %376 = vmatprep.subr.mxu0 0.0
    %377 = vmatpush1.msra.mxu0 0.0
    %378 = vmatprep.subr.mxu0 0.0
    %379 = vmatpush1.msra.mxu0 0.0
    %380 = vmatprep.subr.mxu0 0.0
    %381 = vmatpush1.msra.mxu0 0.0
    %382 = vmatprep.subr.mxu0 0.0
    %383 = vmatpush1.msra.mxu0 0.0
    %384 = vmatprep.subr.mxu0 0.0
    %385 = vmatpush1.msra.mxu0 %v348
    %386 = vmatprep.subr.mxu0 0.0
    %387 = vmatpush1.msra.mxu0 %v347
    %388 = vmatprep.subr.mxu0 0.0
    %389 = vmatpush1.msra.mxu0 %v346
    %390 = vmatprep.subr.mxu0 0.0
    %391 = vmatpush1.msra.mxu0 %v345
    %392 = vmatprep.subr.mxu0 0.0
    %393 = vmatpush2.msra.mxu0 0.0
    %394 = vmatprep.subr.mxu0 0.0
    %395 = vmatpush2.msra.mxu0 0.0
    %396 = vmatprep.subr.mxu0 0.0
    %397 = vmatpush2.msra.mxu0 0.0
    %398 = vmatprep.subr.mxu0 0.0
    %399 = vmatpush2.msra.mxu0 0.0
    %400 = vmatprep.subr.mxu0 0.0
    %401 = vmatpush2.msra.mxu0 0.0
    %402 = vmatprep.subr.mxu0 0.0
    %403 = vmatpush2.msra.mxu0 0.0
    %404 = vmatprep.subr.mxu0 0.0
    %405 = vmatpush2.msra.mxu0 0.0
    %406 = vmatprep.subr.mxu0 0.0
    %407 = vmatpush2.msra.mxu0 0.0
    %408 = vmatprep.subr.mxu0 0.0
    %409 = vmatpush2.msra.mxu0 0.0
    %410 = vmatprep.subr.mxu0 0.0
    %411 = vmatpush2.msra.mxu0 0.0
    %412 = vmatprep.subr.mxu0 0.0
    %413 = vmatpush2.msra.mxu0 0.0
    %414 = vmatprep.subr.mxu0 0.0
    %415 = vmatpush2.msra.mxu0 0.0
    %416 = vmatprep.subr.mxu0 0.0
    %417 = vmatpush2.msra.mxu0 0.0
    %418 = vmatprep.subr.mxu0 0.0
    %419 = vmatpush2.msra.mxu0 0.0
    %420 = vmatprep.subr.mxu0 0.0
    %421 = vmatpush2.msra.mxu0 0.0
    %422 = vmatprep.subr.mxu0 0.0
    %423 = vmatpush2.msra.mxu0 0.0
    %424 = vmatprep.mubr.f32.mxu0 0.0
    %425 = vmatmul.mubr.f32.gmra.mxu0 %v358
    %v426 = vpop.f32.mrf.mxu0
    %v427 = vadd.f32 %v354, %v426
    %v428 = vpop.f32.mrf.mxu0
    %429 = vdwg.mxu0
    %v430 = vmax.f32 %v427, 0.0
    %v431 = vmin.f32 %v430, 1.0
    %v432 = vld [vmem:[%s5] sm:$0x1]
    %vm433 = vcmask 130048
    %v435 = vsel %vm433, %v432, 0
    %v438 = vsel %vm433, %v431, 0
    %440 = vmatprep.subr.mxu0 0.0
    %441 = vmatpush1.xpose.msra.mxu0 0.0
    %442 = vmatprep.subr.mxu0 0.0
    %443 = vmatpush1.xpose.msra.mxu0 0.0
    %444 = vmatprep.subr.mxu0 0.0
    %445 = vmatpush1.xpose.msra.mxu0 0.0
    %446 = vmatprep.subr.mxu0 0.0
    %447 = vmatpush1.xpose.msra.mxu0 0.0
    %448 = vmatprep.subr.mxu0 0.0
    %449 = vmatpush1.xpose.msra.mxu0 0.0
    %450 = vmatprep.subr.mxu0 0.0
    %451 = vmatpush1.xpose.msra.mxu0 0.0
    %452 = vmatprep.subr.mxu0 0.0
    %453 = vmatpush1.xpose.msra.mxu0 0.0
    %454 = vmatprep.subr.mxu0 0.0
    %455 = vmatpush1.xpose.msra.mxu0 0.0
    %456 = vmatprep.subr.mxu0 0.0
    %457 = vmatpush1.xpose.msra.mxu0 0.0
    %458 = vmatprep.subr.mxu0 0.0
    %459 = vmatpush1.xpose.msra.mxu0 0.0
    %460 = vmatprep.subr.mxu0 0.0
    %461 = vmatpush1.xpose.msra.mxu0 0.0
    %462 = vmatprep.subr.mxu0 0.0
    %463 = vmatpush1.xpose.msra.mxu0 0.0
    %464 = vmatprep.subr.mxu0 0.0
    %465 = vmatpush1.xpose.msra.mxu0 0.0
    %466 = vmatprep.subr.mxu0 0.0
    %467 = vmatpush1.xpose.msra.mxu0 0.0
    %468 = vmatprep.subr.mxu0 0.0
    %469 = vmatpush1.xpose.msra.mxu0 0.0
    %470 = vmatprep.subr.mxu0 0.0
    %471 = vmatpush1.xpose.msra.mxu0 %v438
    %472 = vmatprep.subr.mxu0 0.0
    %473 = vmatpush2.xpose.msra.mxu0 0.0
    %474 = vmatprep.subr.mxu0 0.0
    %475 = vmatpush2.xpose.msra.mxu0 0.0
    %476 = vmatprep.subr.mxu0 0.0
    %477 = vmatpush2.xpose.msra.mxu0 0.0
    %478 = vmatprep.subr.mxu0 0.0
    %479 = vmatpush2.xpose.msra.mxu0 0.0
    %480 = vmatprep.subr.mxu0 0.0
    %481 = vmatpush2.xpose.msra.mxu0 0.0
    %482 = vmatprep.subr.mxu0 0.0
    %483 = vmatpush2.xpose.msra.mxu0 0.0
    %484 = vmatprep.subr.mxu0 0.0
    %485 = vmatpush2.xpose.msra.mxu0 0.0
    %486 = vmatprep.subr.mxu0 0.0
    %487 = vmatpush2.xpose.msra.mxu0 0.0
    %488 = vmatprep.subr.mxu0 0.0
    %489 = vmatpush2.xpose.msra.mxu0 0.0
    %490 = vmatprep.subr.mxu0 0.0
    %491 = vmatpush2.xpose.msra.mxu0 0.0
    %492 = vmatprep.subr.mxu0 0.0
    %493 = vmatpush2.xpose.msra.mxu0 0.0
    %494 = vmatprep.subr.mxu0 0.0
    %495 = vmatpush2.xpose.msra.mxu0 0.0
    %496 = vmatprep.subr.mxu0 0.0
    %497 = vmatpush2.xpose.msra.mxu0 0.0
    %498 = vmatprep.subr.mxu0 0.0
    %499 = vmatpush2.xpose.msra.mxu0 0.0
    %500 = vmatprep.subr.mxu0 0.0
    %501 = vmatpush2.xpose.msra.mxu0 0.0
    %502 = vmatprep.subr.mxu0 0.0
    %503 = vmatpush2.xpose.msra.mxu0 0.0
    %504 = vmatprep.mubr.f32.mxu0 0.0
    %505 = vmatmul.mubr.f32.gmra.mxu0 %v435
    %v506 = vpop.f32.mrf.mxu0
    %v507 = vadd.f32 0.0, %v506
    %v508 = vpop.f32.mrf.mxu0
    %509 = vdwg.mxu0
    %vm510 = vcmask 57344
    %511 = vst.msk [vmem:[#allocation2] sm:$0x1] %vm510, %v507
    // Predicated region
    $region26: #{bbnnc_forward.1} parent=1 // pred_check
      _
    $region27: #{bbnnc_forward.1} parent=1 // pred_check_branch
      %513 = sbr.rel (0) target = $region29
    $region28: #{bbnnc_forward.1} parent=1 // pred_region
      %s515 = ssub.s32 16, 16
      %516 = vsyncadd [#allocation3], %s515
      %s518 = sshll.u32 [#allocation2], 4
      %s519 = int_to_ptr.vmem [resolvable:$true] %s518
      %521 = dma.vmem_to_hbm [thread:$0]  %s519, 16, %s6, [#allocation3]
    $region29: #{bbnnc_forward.1} parent=1 // pred_fallthru
      _
    // Predicated region
    $region30: #{bbnnc_forward.1} parent=1 // pred_check
      _
    $region31: #{bbnnc_forward.1} parent=1 // pred_check_branch
      %523 = sbr.rel (0) target = $region33
    $region32: #{bbnnc_forward.1} parent=1 // pred_region
      %524 = dma.done [#allocation3], 16
    $region33: #{bbnnc_forward.1} parent=1 // pred_fallthru
      _
    %525 = vsyncpa [#allocation3], 1

</llo_original>
